<compile_context>
chip_gen: v6e
topology: v6e:2x2x1
jax: 0.10.0
libtpu: 0.0.40
codegen_flags: <defaults>
</compile_context>

<pallas_src>
import jax
import jax.numpy as jnp
import numpy as np
from jax.experimental import pallas as pl
from jax.experimental.pallas import tpu as pltpu


# ----------------------------- Pallas kernel ------------------------------

def _head_kernel(x_ref, w_ref, b_ref, o_ref):
    # x_ref: (Bt, E); w_ref: (E, C); b_ref: (1, C); o_ref: (Bt, C)
    o_ref[...] = (
        jnp.dot(x_ref[...], w_ref[...], preferred_element_type=jnp.float32)
        + b_ref[...]
    )


# ----------------------------- wrappers ------------------------------------

def prepare_head_params(w_torch, b_torch):
    """Hoist the torch-layout -> GEMM-layout transforms out of the forward path.

    w_torch: (num_classes, embedding_size)  (PyTorch nn.Linear weight layout)
    b_torch: (num_classes,)
    """
    C, E = w_torch.shape
    return {
        "w_gemm": jnp.asarray(w_torch, jnp.float32).T.reshape(E, C),  # (E, C)
        "b2d": jnp.asarray(b_torch, jnp.float32).reshape(1, C),       # (1, C)
    }


def supervised_head_forward(x, params, *, max_block_b=512):
    """y = x @ W^T + b via a single Pallas kernel (batch-tiled only if B is large)."""
    B, E = x.shape
    w = params["w_gemm"]
    b = params["b2d"]
    C = w.shape[1]

    # For small B: one block, one grid step (no per-step overhead).
    # For large B: tile the batch and mark the axis "parallel" (megacore on v7x).
    bt = B if B <= max_block_b else max_block_b
    nb = pl.cdiv(B, bt)
    Bp = nb * bt
    xp = x if Bp == B else jnp.pad(x, ((0, Bp - B), (0, 0)))

    out = pl.pallas_call(
        _head_kernel,
        out_shape=jax.ShapeDtypeStruct((Bp, C), jnp.float32),
        grid=(nb,),
        in_specs=[
            pl.BlockSpec((bt, E), lambda i: (i, 0)),
            pl.BlockSpec((E, C), lambda i: (0, 0)),
            pl.BlockSpec((1, C), lambda i: (0, 0)),
        ],
        out_specs=pl.BlockSpec((bt, C), lambda i: (i, 0)),
        compiler_params=pltpu.CompilerParams(
            dimension_semantics=("parallel",),
        ),
    )(xp, w, b)
    return out if Bp == B else out[:B]


# ----------------------------- pure-JAX reference --------------------------

def reference_forward(x, w_torch, b_torch):
    return x @ w_torch.T + b_torch


# ----------------------------- main -----------------------------------------

if __name__ == "__main__":
    embedding_size = 32
    num_classes = 9
    batch = 2

    key = jax.random.PRNGKey(0)
    kx, kw, kb = jax.random.split(key, 3)

    x = jax.random.normal(kx, (batch, embedding_size), jnp.float32)
    w_torch = (jax.random.normal(kw, (num_classes, embedding_size), jnp.float32)
               / np.sqrt(embedding_size)).astype(jnp.float32)
    b_torch = (jax.random.normal(kb, (num_classes,), jnp.float32)
               / np.sqrt(embedding_size)).astype(jnp.float32)

    params = prepare_head_params(w_torch, b_torch)   # one-time weight prep (hoisted)

    fwd = jax.jit(supervised_head_forward)
    y = fwd(x, params)
    y = jax.block_until_ready(y)

    y_ref = reference_forward(x, w_torch, b_torch)
    assert y.shape == (batch, num_classes), y.shape
    np.testing.assert_allclose(np.asarray(y), np.asarray(y_ref), rtol=2e-2, atol=2e-2)
    print("KERNEL_OK")
</pallas_src>

<mosaic_0001>
module attributes {stable_mosaic.version = 11 : i64} {
  func.func @_head_kernel(%arg0: i32, %arg1: memref<2x32xf32, #tpu.memory_space<vmem>>, %arg2: memref<32x9xf32, #tpu.memory_space<vmem>>, %arg3: memref<1x9xf32, #tpu.memory_space<vmem>>, %arg4: memref<2x9xf32, #tpu.memory_space<vmem>>) attributes {dimension_semantics = [#tpu.dimension_semantics<parallel>], iteration_bounds = array<i64: 1>, scalar_prefetch = 0 : i64, scratch_operands = 0 : i64, tpu.core_type = #tpu.core_type<tc>, window_params = [{transform_indices = @transform_0, window_bounds = array<i64: 2, 32>}, {pipeline_mode = #tpu.pipeline_mode<synchronous>, transform_indices = @transform_1, window_bounds = array<i64: 32, 9>}, {pipeline_mode = #tpu.pipeline_mode<synchronous>, transform_indices = @transform_2, window_bounds = array<i64: 1, 9>}, {transform_indices = @transform_3, window_bounds = array<i64: 2, 9>}]} {
    %c0 = arith.constant 0 : index
    %c0_0 = arith.constant 0 : index
    %0 = vector.load %arg1[%c0, %c0_0] : memref<2x32xf32, #tpu.memory_space<vmem>>, vector<2x32xf32>
    %c0_1 = arith.constant 0 : index
    %c0_2 = arith.constant 0 : index
    %1 = vector.load %arg2[%c0_1, %c0_2] : memref<32x9xf32, #tpu.memory_space<vmem>>, vector<32x9xf32>
    %cst = arith.constant dense<0.000000e+00> : vector<2x9xf32>
    %2 = tpu.matmul %0, %1, %cst {dimension_numbers = #tpu.dot_dimension_numbers<[1], [0], [0], [1], [0, 0, 1, 1], [], []>} : vector<2x32xf32>, vector<32x9xf32>, vector<2x9xf32> -> vector<2x9xf32>
    %c0_3 = arith.constant 0 : index
    %c0_4 = arith.constant 0 : index
    %3 = vector.load %arg3[%c0_3, %c0_4] : memref<1x9xf32, #tpu.memory_space<vmem>>, vector<1x9xf32>
    %4 = vector.broadcast %3 : vector<1x9xf32> to vector<2x9xf32>
    %5 = arith.addf %2, %4 : vector<2x9xf32>
    %c0_5 = arith.constant 0 : index
    %c0_6 = arith.constant 0 : index
    %6 = vector.load %arg4[%c0_5, %c0_6] : memref<2x9xf32, #tpu.memory_space<vmem>>, vector<2x9xf32>
    tpu.vector_store %arg4[%c0_5, %c0_6], %5 {strides = array<i32>} : memref<2x9xf32, #tpu.memory_space<vmem>>, vector<2x9xf32>,
    return
  }
  func.func @transform_0(%arg0: i32) -> (i32, i32) {
    %c0_i32 = arith.constant 0 : i32
    %c0_i32_0 = arith.constant 0 : i32
    return %arg0, %c0_i32 : i32, i32
  }
  func.func @transform_1(%arg0: i32) -> (i32, i32) {
    %c0_i32 = arith.constant 0 : i32
    %c0_i32_0 = arith.constant 0 : i32
    %c0_i32_1 = arith.constant 0 : i32
    return %c0_i32, %c0_i32_0 : i32, i32
  }
  func.func @transform_2(%arg0: i32) -> (i32, i32) {
    %c0_i32 = arith.constant 0 : i32
    %c0_i32_0 = arith.constant 0 : i32
    %c0_i32_1 = arith.constant 0 : i32
    return %c0_i32, %c0_i32_0 : i32, i32
  }
  func.func @transform_3(%arg0: i32) -> (i32, i32) {
    %c0_i32 = arith.constant 0 : i32
    %c0_i32_0 = arith.constant 0 : i32
    return %arg0, %c0_i32 : i32, i32
  }
}

</mosaic_0001>

<llo_original>
// kernel: supervised_head_forward.1
$region0: #{supervised_head_forward.1}
  #allocation0 [shape = 'u32[]', space=smem, size = 0x4, offset = 0x4, fixed_abs, tag = 'smem constant byte address 0x4 - core index']
  #allocation1 [shape = 'u32[144,128]{1,0:T(1,128)}', space=vmem, size = 0x12000, scoped, tag = 'internal scratch']
  %s0 = inlined_call_operand.vmem [shape: f32[2,32], index: 0, kind: input, shape index: {}]
  %s1 = inlined_call_operand.vmem [shape: f32[32,9], index: 1, kind: input, shape index: {}]
  %s2 = inlined_call_operand.vmem [shape: f32[1,9], index: 2, kind: input, shape index: {}]
  %s3 = inlined_call_operand.hbm [shape: f32[2,9], index: 3, kind: output, shape index: {}]
  %s4 = sld [smem:[#allocation0]]
  $region22: #{supervised_head_forward.1} parent=0
    _
  %s6 = ssub.s32 1, %s4
  %s7 = scalar_select 0, %s6, %s4
  $region1: #{supervised_head_forward.1} parent=0
    #allocation2 [shape = 'u8[1024]{0}', space=vmem, size = 0x400, scoped, tag = 'output window, operand 0, single buffered']
    #allocation3 [shape = 's32[1]{0}', space=sflag, size = 0x4, scoped, tag = 'scoped memory for supervised_head_forward.1']
    %8 = vsyncpa [#allocation3], 0
    // Predicated region
    $region2: #{supervised_head_forward.1} parent=1 // pred_check
      _
    $region3: #{supervised_head_forward.1} parent=1 // pred_check_branch
      %10 = sbr.rel (0) target = $region5
    $region4: #{supervised_head_forward.1} parent=1 // pred_region
      _
    $region5: #{supervised_head_forward.1} parent=1 // pred_fallthru
      _
    // Predicated region
    $region6: #{supervised_head_forward.1} parent=1 // pred_check
      _
    $region7: #{supervised_head_forward.1} parent=1 // pred_check_branch
      %12 = sbr.rel (0) target = $region9
    $region8: #{supervised_head_forward.1} parent=1 // pred_region
      _
    $region9: #{supervised_head_forward.1} parent=1 // pred_fallthru
      _
    // Predicated region
    $region10: #{supervised_head_forward.1} parent=1 // pred_check
      _
    $region11: #{supervised_head_forward.1} parent=1 // pred_check_branch
      %14 = sbr.rel (0) target = $region13
    $region12: #{supervised_head_forward.1} parent=1 // pred_region
      _
    $region13: #{supervised_head_forward.1} parent=1 // pred_fallthru
      _
    %v15 = vld [vmem:[%s0] sm:$0x3]
    %v16 = vld [vmem:[%s1] sm:$0xff]
    %v17 = vld [vmem:[%s1 + $0x8] sm:$0xff]
    %v18 = vld [vmem:[%s1 + $0x10] sm:$0xff]
    %v19 = vld [vmem:[%s1 + $0x18] sm:$0xff]
    %v20 = vld [vmem:[%s2] sm:$0x1]
    %v22 = vlaneseq
    %v23 = vshrl.u32 %v22, 7
    %v24 = vsub.s32 0, %v23
    %v25 = vrot.slane %v20, %v24
    %vm27 = vcmask 261120
    %v29 = vsel %vm27, %v15, 0
    %31 = vmatprep.subr.mxu0 0.0
    %32 = vmatpush1.msra.mxu0 0.0
    %33 = vmatprep.subr.mxu0 0.0
    %34 = vmatpush1.msra.mxu0 0.0
    %35 = vmatprep.subr.mxu0 0.0
    %36 = vmatpush1.msra.mxu0 0.0
    %37 = vmatprep.subr.mxu0 0.0
    %38 = vmatpush1.msra.mxu0 0.0
    %39 = vmatprep.subr.mxu0 0.0
    %40 = vmatpush1.msra.mxu0 0.0
    %41 = vmatprep.subr.mxu0 0.0
    %42 = vmatpush1.msra.mxu0 0.0
    %43 = vmatprep.subr.mxu0 0.0
    %44 = vmatpush1.msra.mxu0 0.0
    %45 = vmatprep.subr.mxu0 0.0
    %46 = vmatpush1.msra.mxu0 0.0
    %47 = vmatprep.subr.mxu0 0.0
    %48 = vmatpush1.msra.mxu0 0.0
    %49 = vmatprep.subr.mxu0 0.0
    %50 = vmatpush1.msra.mxu0 0.0
    %51 = vmatprep.subr.mxu0 0.0
    %52 = vmatpush1.msra.mxu0 0.0
    %53 = vmatprep.subr.mxu0 0.0
    %54 = vmatpush1.msra.mxu0 0.0
    %55 = vmatprep.subr.mxu0 0.0
    %56 = vmatpush1.msra.mxu0 %v19
    %57 = vmatprep.subr.mxu0 0.0
    %58 = vmatpush1.msra.mxu0 %v18
    %59 = vmatprep.subr.mxu0 0.0
    %60 = vmatpush1.msra.mxu0 %v17
    %61 = vmatprep.subr.mxu0 0.0
    %62 = vmatpush1.msra.mxu0 %v16
    %63 = vmatprep.subr.mxu0 0.0
    %64 = vmatpush2.msra.mxu0 0.0
    %65 = vmatprep.subr.mxu0 0.0
    %66 = vmatpush2.msra.mxu0 0.0
    %67 = vmatprep.subr.mxu0 0.0
    %68 = vmatpush2.msra.mxu0 0.0
    %69 = vmatprep.subr.mxu0 0.0
    %70 = vmatpush2.msra.mxu0 0.0
    %71 = vmatprep.subr.mxu0 0.0
    %72 = vmatpush2.msra.mxu0 0.0
    %73 = vmatprep.subr.mxu0 0.0
    %74 = vmatpush2.msra.mxu0 0.0
    %75 = vmatprep.subr.mxu0 0.0
    %76 = vmatpush2.msra.mxu0 0.0
    %77 = vmatprep.subr.mxu0 0.0
    %78 = vmatpush2.msra.mxu0 0.0
    %79 = vmatprep.subr.mxu0 0.0
    %80 = vmatpush2.msra.mxu0 0.0
    %81 = vmatprep.subr.mxu0 0.0
    %82 = vmatpush2.msra.mxu0 0.0
    %83 = vmatprep.subr.mxu0 0.0
    %84 = vmatpush2.msra.mxu0 0.0
    %85 = vmatprep.subr.mxu0 0.0
    %86 = vmatpush2.msra.mxu0 0.0
    %87 = vmatprep.subr.mxu0 0.0
    %88 = vmatpush2.msra.mxu0 0.0
    %89 = vmatprep.subr.mxu0 0.0
    %90 = vmatpush2.msra.mxu0 0.0
    %91 = vmatprep.subr.mxu0 0.0
    %92 = vmatpush2.msra.mxu0 0.0
    %93 = vmatprep.subr.mxu0 0.0
    %94 = vmatpush2.msra.mxu0 0.0
    %95 = vmatprep.mubr.f32.mxu0 0.0
    %96 = vmatmul.mubr.f32.gmra.mxu0 %v29
    %v97 = vpop.f32.mrf.mxu0
    %v98 = vadd.f32 %v25, %v97
    %v99 = vpop.f32.mrf.mxu0
    %100 = vdwg.mxu0
    %vm101 = vcmask 66560
    %102 = vst.msk [vmem:[#allocation2] sm:$0x3] %vm101, %v98
    // Predicated region
    $region14: #{supervised_head_forward.1} parent=1 // pred_check
      _
    $region15: #{supervised_head_forward.1} parent=1 // pred_check_branch
      %104 = sbr.rel (0) target = $region17
    $region16: #{supervised_head_forward.1} parent=1 // pred_region
      %s106 = ssub.s32 32, 32
      %107 = vsyncadd [#allocation3], %s106
      %s109 = sshll.u32 [#allocation2], 4
      %s110 = int_to_ptr.vmem [resolvable:$true] %s109
      %112 = dma.vmem_to_hbm [thread:$0]  %s110, 32, %s3, [#allocation3]
    $region17: #{supervised_head_forward.1} parent=1 // pred_fallthru
      _
    // Predicated region
    $region18: #{supervised_head_forward.1} parent=1 // pred_check
      _
    $region19: #{supervised_head_forward.1} parent=1 // pred_check_branch
      %114 = sbr.rel (0) target = $region21
    $region20: #{supervised_head_forward.1} parent=1 // pred_region
      %115 = dma.done [#allocation3], 32
    $region21: #{supervised_head_forward.1} parent=1 // pred_fallthru
      _
    %116 = vsyncpa [#allocation3], 1

</llo_original>
